<compile_context>
chip_gen: v6e
topology: v6e:2x2x1
jax: 0.10.0
libtpu: 0.0.40
codegen_flags: <defaults>
</compile_context>

<pallas_src>
import functools
import math

import jax
import jax.numpy as jnp
from jax.experimental import pallas as pl
from jax.experimental.pallas import tpu as pltpu


def _round_up(n, m):
    return ((n + m - 1) // m) * m


def mvae_kernel(
    x_ref, eps_ref,
    w_enc_ref, b_enc_ref,
    w_ml_ref, b_ml_ref,
    w_d1_ref, b_d1_ref,
    w_d2_ref, b_d2_ref,
    dec_ref, mulog_ref,
    *, latent, matmul_dtype,
):
    x = x_ref[...]
    eps = eps_ref[...]

    def mm(a, w_ref):
        w = w_ref[...]
        if matmul_dtype is not None:
            # MXU operands in bf16; accumulate + all elementwise math in f32.
            a = a.astype(matmul_dtype)
            w = w.astype(matmul_dtype)
        return jnp.dot(a, w, preferred_element_type=jnp.float32)

    # Encoder: tanh(x @ W_enc + b_enc)
    enc = jnp.tanh(mm(x, w_enc_ref) + b_enc_ref[...])

    # Fused mu / log_sigma head: one wide (2*latent) matmul + one wide output slab.
    mulog = mm(enc, w_ml_ref) + b_ml_ref[...]
    mu = mulog[:, :latent]
    lsig = mulog[:, latent:]

    # Reparameterization.
    z = mu + jnp.exp(lsig) * eps

    # Decoder: linear1 -> tanh -> linear2
    h = jnp.tanh(mm(z, w_d1_ref) + b_d1_ref[...])
    dec = mm(h, w_d2_ref) + b_d2_ref[...]

    dec_ref[...] = dec.astype(dec_ref.dtype)
    mulog_ref[...] = mulog.astype(mulog_ref.dtype)


def mvae_forward(x, eps, params, *, tile_b=None, use_bf16_matmul=False):
    """x: (B, total_items) f32, eps: (B, latent) f32 standard-normal noise.

    Returns (dec_out, z_mean, z_log_sigma), matching MVAE.forward.
    """
    B, total_items = x.shape
    latent = eps.shape[1]
    (w_enc, b_enc, w_ml, b_ml, w_d1, b_d1, w_d2, b_d2) = params

    # Batch tile: multiple of 8 sublanes, capped at 256 rows per grid step.
    if tile_b is None:
        tile_b = min(256, _round_up(B, 8))
    Bp = _round_up(B, tile_b)
    if Bp != B:
        pad = Bp - B
        x = jnp.pad(x, ((0, pad), (0, 0)))
        eps = jnp.pad(eps, ((0, pad), (0, 0)))

    grid = (Bp // tile_b,)

    def batch_spec(cols):
        # Batch-tiled block: grid index i selects rows [i*tile_b, (i+1)*tile_b).
        return pl.BlockSpec((tile_b, cols), lambda i: (i, 0))

    def weight_spec(shape):
        # Full-array block, identical for every grid step (stays VMEM-resident).
        return pl.BlockSpec(shape, lambda i: (0, 0))

    inputs = (x, eps, w_enc, b_enc, w_ml, b_ml, w_d1, b_d1, w_d2, b_d2)

    in_specs = [
        batch_spec(total_items),          # x
        batch_spec(latent),               # eps
        weight_spec(w_enc.shape), weight_spec(b_enc.shape),
        weight_spec(w_ml.shape), weight_spec(b_ml.shape),
        weight_spec(w_d1.shape), weight_spec(b_d1.shape),
        weight_spec(w_d2.shape), weight_spec(b_d2.shape),
    ]
    out_specs = (
        batch_spec(total_items),          # dec
        batch_spec(2 * latent),           # fused [mu | log_sigma] slab
    )

    # Advisory cost estimate so XLA can schedule/overlap this small call.
    flops = 2 * Bp * (total_items * latent      # encoder matmul
                      + latent * 2 * latent     # fused mu/log_sigma head
                      + latent * latent         # decoder.linear1
                      + latent * total_items)   # decoder.linear2
    transcendentals = 3 * Bp * latent            # 2x tanh + 1x exp
    bytes_accessed = (
        sum(int(a.size) * a.dtype.itemsize for a in inputs)
        + Bp * total_items * 4 + Bp * 2 * latent * 4
    )

    kernel = functools.partial(
        mvae_kernel,
        latent=latent,
        matmul_dtype=jnp.bfloat16 if use_bf16_matmul else None,
    )

    dec, mulog = pl.pallas_call(
        kernel,
        grid=grid,
        out_shape=(
            jax.ShapeDtypeStruct((Bp, total_items), jnp.float32),  # dec_out
            jax.ShapeDtypeStruct((Bp, 2 * latent), jnp.float32),   # [mu | log_sigma]
        ),
        in_specs=in_specs,
        out_specs=out_specs,
        compiler_params=pltpu.CompilerParams(
            dimension_semantics=("parallel",),
        ),
        cost_estimate=pl.CostEstimate(
            flops=flops,
            transcendentals=transcendentals,
            bytes_accessed=bytes_accessed,
        ),
    )(*inputs)

    dec = dec[:B]
    z_mean = mulog[:B, :latent]
    z_log_sigma = mulog[:B, latent:]
    return dec, z_mean, z_log_sigma


def xavier_normal(key, fan_in, fan_out):
    # Matches nn.init.xavier_normal_ (gain=1): std = sqrt(2 / (fan_in + fan_out)).
    std = math.sqrt(2.0 / (fan_in + fan_out))
    # Stored as (in, out) so the kernel does x @ W (== torch's x @ W_torch.T).
    return std * jax.random.normal(key, (fan_in, fan_out), dtype=jnp.float32)


def init_params(key, total_items, latent):
    keys = jax.random.split(key, 4)
    # Encoder.linear1: total_items -> latent
    w_enc = xavier_normal(keys[0], total_items, latent)
    b_enc = jnp.zeros((1, latent), jnp.float32)
    # MVAE.linear1: latent -> 2*latent (fused mu / log_sigma head, kept fused)
    w_ml = xavier_normal(keys[1], latent, 2 * latent)
    b_ml = jnp.zeros((1, 2 * latent), jnp.float32)
    # Decoder.linear1: latent -> latent
    w_d1 = xavier_normal(keys[2], latent, latent)
    b_d1 = jnp.zeros((1, latent), jnp.float32)
    # Decoder.linear2: latent -> total_items
    w_d2 = xavier_normal(keys[3], latent, total_items)
    b_d2 = jnp.zeros((1, total_items), jnp.float32)
    return (w_enc, b_enc, w_ml, b_ml, w_d1, b_d1, w_d2, b_d2)


def mvae_reference(x, eps, params):
    (w_enc, b_enc, w_ml, b_ml, w_d1, b_d1, w_d2, b_d2) = params
    latent = eps.shape[1]
    enc = jnp.tanh(x @ w_enc + b_enc)
    mulog = enc @ w_ml + b_ml
    mu = mulog[:, :latent]
    lsig = mulog[:, latent:]
    z = mu + jnp.exp(lsig) * eps
    h = jnp.tanh(z @ w_d1 + b_d1)
    dec = h @ w_d2 + b_d2
    return dec, mu, lsig


if __name__ == "__main__":
    key = jax.random.PRNGKey(0)
    k_x, k_eps, k_p = jax.random.split(key, 3)

    B = 8              # batch (number of users)
    TOTAL_ITEMS = 64   # hyper_params['total_items']
    LATENT = 32        # hyper_params['latent_size']

    x = jax.random.uniform(k_x, (B, TOTAL_ITEMS), dtype=jnp.float32)
    # torch code draws std_z ~ N(0,1) via numpy; here a deterministic JAX draw.
    eps = jax.random.normal(k_eps, (B, LATENT), dtype=jnp.float32)

    params = init_params(k_p, TOTAL_ITEMS, LATENT)

    dec_out, z_mean, z_log_sigma = mvae_forward(x, eps, params)
    jax.block_until_ready((dec_out, z_mean, z_log_sigma))

    # Correctness check against plain-JAX reference (f32 MXU path).
    ref_dec, ref_mu, ref_ls = mvae_reference(x, eps, params)
    assert jnp.allclose(dec_out, ref_dec, atol=1e-5, rtol=1e-5)
    assert jnp.allclose(z_mean, ref_mu, atol=1e-5, rtol=1e-5)
    assert jnp.allclose(z_log_sigma, ref_ls, atol=1e-5, rtol=1e-5)

    # Optional bf16-operand path (f32 accumulation) — looser tolerance.
    dec_bf, mu_bf, ls_bf = mvae_forward(x, eps, params, use_bf16_matmul=True)
    jax.block_until_ready((dec_bf, mu_bf, ls_bf))
    assert jnp.allclose(dec_bf, ref_dec, atol=5e-2, rtol=5e-2)

    print("KERNEL_OK")
</pallas_src>

<mosaic_0001>
module attributes {stable_mosaic.version = 11 : i64} {
  func.func @mvae_kernel(%arg0: i32, %arg1: memref<8x64xf32, #tpu.memory_space<vmem>>, %arg2: memref<8x32xf32, #tpu.memory_space<vmem>>, %arg3: memref<64x32xf32, #tpu.memory_space<vmem>>, %arg4: memref<1x32xf32, #tpu.memory_space<vmem>>, %arg5: memref<32x64xf32, #tpu.memory_space<vmem>>, %arg6: memref<1x64xf32, #tpu.memory_space<vmem>>, %arg7: memref<32x32xf32, #tpu.memory_space<vmem>>, %arg8: memref<1x32xf32, #tpu.memory_space<vmem>>, %arg9: memref<32x64xf32, #tpu.memory_space<vmem>>, %arg10: memref<1x64xf32, #tpu.memory_space<vmem>>, %arg11: memref<8x64xf32, #tpu.memory_space<vmem>>, %arg12: memref<8x64xf32, #tpu.memory_space<vmem>>) attributes {dimension_semantics = [#tpu.dimension_semantics<parallel>], iteration_bounds = array<i64: 1>, scalar_prefetch = 0 : i64, scratch_operands = 0 : i64, tpu.core_type = #tpu.core_type<tc>, window_params = [{transform_indices = @transform_0, window_bounds = array<i64: 8, 64>}, {transform_indices = @transform_1, window_bounds = array<i64: 8, 32>}, {pipeline_mode = #tpu.pipeline_mode<synchronous>, transform_indices = @transform_2, window_bounds = array<i64: 64, 32>}, {pipeline_mode = #tpu.pipeline_mode<synchronous>, transform_indices = @transform_3, window_bounds = array<i64: 1, 32>}, {pipeline_mode = #tpu.pipeline_mode<synchronous>, transform_indices = @transform_4, window_bounds = array<i64: 32, 64>}, {pipeline_mode = #tpu.pipeline_mode<synchronous>, transform_indices = @transform_5, window_bounds = array<i64: 1, 64>}, {pipeline_mode = #tpu.pipeline_mode<synchronous>, transform_indices = @transform_6, window_bounds = array<i64: 32, 32>}, {pipeline_mode = #tpu.pipeline_mode<synchronous>, transform_indices = @transform_7, window_bounds = array<i64: 1, 32>}, {pipeline_mode = #tpu.pipeline_mode<synchronous>, transform_indices = @transform_8, window_bounds = array<i64: 32, 64>}, {pipeline_mode = #tpu.pipeline_mode<synchronous>, transform_indices = @transform_9, window_bounds = array<i64: 1, 64>}, {transform_indices = @transform_10, window_bounds = array<i64: 8, 64>}, {transform_indices = @transform_11, window_bounds = array<i64: 8, 64>}]} {
    %c0 = arith.constant 0 : index
    %c0_0 = arith.constant 0 : index
    %0 = vector.load %arg1[%c0, %c0_0] : memref<8x64xf32, #tpu.memory_space<vmem>>, vector<8x64xf32>
    %c0_1 = arith.constant 0 : index
    %c0_2 = arith.constant 0 : index
    %1 = vector.load %arg2[%c0_1, %c0_2] : memref<8x32xf32, #tpu.memory_space<vmem>>, vector<8x32xf32>
    %c0_3 = arith.constant 0 : index
    %c0_4 = arith.constant 0 : index
    %2 = vector.load %arg3[%c0_3, %c0_4] : memref<64x32xf32, #tpu.memory_space<vmem>>, vector<64x32xf32>
    %cst = arith.constant dense<0.000000e+00> : vector<8x32xf32>
    %3 = tpu.matmul %0, %2, %cst {dimension_numbers = #tpu.dot_dimension_numbers<[1], [0], [0], [1], [0, 0, 1, 1], [], []>} : vector<8x64xf32>, vector<64x32xf32>, vector<8x32xf32> -> vector<8x32xf32>
    %c0_5 = arith.constant 0 : index
    %c0_6 = arith.constant 0 : index
    %4 = vector.load %arg4[%c0_5, %c0_6] : memref<1x32xf32, #tpu.memory_space<vmem>>, vector<1x32xf32>
    %5 = vector.broadcast %4 : vector<1x32xf32> to vector<8x32xf32>
    %6 = arith.addf %3, %5 : vector<8x32xf32>
    %7 = math.tanh %6 : vector<8x32xf32>
    %c0_7 = arith.constant 0 : index
    %c0_8 = arith.constant 0 : index
    %8 = vector.load %arg5[%c0_7, %c0_8] : memref<32x64xf32, #tpu.memory_space<vmem>>, vector<32x64xf32>
    %cst_9 = arith.constant dense<0.000000e+00> : vector<8x64xf32>
    %9 = tpu.matmul %7, %8, %cst_9 {dimension_numbers = #tpu.dot_dimension_numbers<[1], [0], [0], [1], [0, 0, 1, 1], [], []>} : vector<8x32xf32>, vector<32x64xf32>, vector<8x64xf32> -> vector<8x64xf32>
    %c0_10 = arith.constant 0 : index
    %c0_11 = arith.constant 0 : index
    %10 = vector.load %arg6[%c0_10, %c0_11] : memref<1x64xf32, #tpu.memory_space<vmem>>, vector<1x64xf32>
    %11 = vector.broadcast %10 : vector<1x64xf32> to vector<8x64xf32>
    %12 = arith.addf %9, %11 : vector<8x64xf32>
    %13 = vector.extract_strided_slice %12 {offsets = [0, 0], sizes = [8, 32], strides = [1, 1]} : vector<8x64xf32> to vector<8x32xf32>
    %14 = vector.extract_strided_slice %12 {offsets = [0, 32], sizes = [8, 32], strides = [1, 1]} : vector<8x64xf32> to vector<8x32xf32>
    %15 = math.exp %14 : vector<8x32xf32>
    %16 = arith.mulf %15, %1 : vector<8x32xf32>
    %17 = arith.addf %13, %16 : vector<8x32xf32>
    %c0_12 = arith.constant 0 : index
    %c0_13 = arith.constant 0 : index
    %18 = vector.load %arg7[%c0_12, %c0_13] : memref<32x32xf32, #tpu.memory_space<vmem>>, vector<32x32xf32>
    %cst_14 = arith.constant dense<0.000000e+00> : vector<8x32xf32>
    %19 = tpu.matmul %17, %18, %cst_14 {dimension_numbers = #tpu.dot_dimension_numbers<[1], [0], [0], [1], [0, 0, 1, 1], [], []>} : vector<8x32xf32>, vector<32x32xf32>, vector<8x32xf32> -> vector<8x32xf32>
    %c0_15 = arith.constant 0 : index
    %c0_16 = arith.constant 0 : index
    %20 = vector.load %arg8[%c0_15, %c0_16] : memref<1x32xf32, #tpu.memory_space<vmem>>, vector<1x32xf32>
    %21 = vector.broadcast %20 : vector<1x32xf32> to vector<8x32xf32>
    %22 = arith.addf %19, %21 : vector<8x32xf32>
    %23 = math.tanh %22 : vector<8x32xf32>
    %c0_17 = arith.constant 0 : index
    %c0_18 = arith.constant 0 : index
    %24 = vector.load %arg9[%c0_17, %c0_18] : memref<32x64xf32, #tpu.memory_space<vmem>>, vector<32x64xf32>
    %cst_19 = arith.constant dense<0.000000e+00> : vector<8x64xf32>
    %25 = tpu.matmul %23, %24, %cst_19 {dimension_numbers = #tpu.dot_dimension_numbers<[1], [0], [0], [1], [0, 0, 1, 1], [], []>} : vector<8x32xf32>, vector<32x64xf32>, vector<8x64xf32> -> vector<8x64xf32>
    %c0_20 = arith.constant 0 : index
    %c0_21 = arith.constant 0 : index
    %26 = vector.load %arg10[%c0_20, %c0_21] : memref<1x64xf32, #tpu.memory_space<vmem>>, vector<1x64xf32>
    %27 = vector.broadcast %26 : vector<1x64xf32> to vector<8x64xf32>
    %28 = arith.addf %25, %27 : vector<8x64xf32>
    %c0_22 = arith.constant 0 : index
    %c0_23 = arith.constant 0 : index
    %29 = vector.load %arg11[%c0_22, %c0_23] : memref<8x64xf32, #tpu.memory_space<vmem>>, vector<8x64xf32>
    tpu.vector_store %arg11[%c0_22, %c0_23], %28 {strides = array<i32>} : memref<8x64xf32, #tpu.memory_space<vmem>>, vector<8x64xf32>,
    %c0_24 = arith.constant 0 : index
    %c0_25 = arith.constant 0 : index
    %30 = vector.load %arg12[%c0_24, %c0_25] : memref<8x64xf32, #tpu.memory_space<vmem>>, vector<8x64xf32>
    tpu.vector_store %arg12[%c0_24, %c0_25], %12 {strides = array<i32>} : memref<8x64xf32, #tpu.memory_space<vmem>>, vector<8x64xf32>,
    return
  }
  func.func @transform_0(%arg0: i32) -> (i32, i32) {
    %c0_i32 = arith.constant 0 : i32
    %c0_i32_0 = arith.constant 0 : i32
    return %arg0, %c0_i32 : i32, i32
  }
  func.func @transform_1(%arg0: i32) -> (i32, i32) {
    %c0_i32 = arith.constant 0 : i32
    %c0_i32_0 = arith.constant 0 : i32
    return %arg0, %c0_i32 : i32, i32
  }
  func.func @transform_2(%arg0: i32) -> (i32, i32) {
    %c0_i32 = arith.constant 0 : i32
    %c0_i32_0 = arith.constant 0 : i32
    %c0_i32_1 = arith.constant 0 : i32
    return %c0_i32, %c0_i32_0 : i32, i32
  }
  func.func @transform_3(%arg0: i32) -> (i32, i32) {
    %c0_i32 = arith.constant 0 : i32
    %c0_i32_0 = arith.constant 0 : i32
    %c0_i32_1 = arith.constant 0 : i32
    return %c0_i32, %c0_i32_0 : i32, i32
  }
  func.func @transform_4(%arg0: i32) -> (i32, i32) {
    %c0_i32 = arith.constant 0 : i32
    %c0_i32_0 = arith.constant 0 : i32
    %c0_i32_1 = arith.constant 0 : i32
    return %c0_i32, %c0_i32_0 : i32, i32
  }
  func.func @transform_5(%arg0: i32) -> (i32, i32) {
    %c0_i32 = arith.constant 0 : i32
    %c0_i32_0 = arith.constant 0 : i32
    %c0_i32_1 = arith.constant 0 : i32
    return %c0_i32, %c0_i32_0 : i32, i32
  }
  func.func @transform_6(%arg0: i32) -> (i32, i32) {
    %c0_i32 = arith.constant 0 : i32
    %c0_i32_0 = arith.constant 0 : i32
    %c0_i32_1 = arith.constant 0 : i32
    return %c0_i32, %c0_i32_0 : i32, i32
  }
  func.func @transform_7(%arg0: i32) -> (i32, i32) {
    %c0_i32 = arith.constant 0 : i32
    %c0_i32_0 = arith.constant 0 : i32
    %c0_i32_1 = arith.constant 0 : i32
    return %c0_i32, %c0_i32_0 : i32, i32
  }
  func.func @transform_8(%arg0: i32) -> (i32, i32) {
    %c0_i32 = arith.constant 0 : i32
    %c0_i32_0 = arith.constant 0 : i32
    %c0_i32_1 = arith.constant 0 : i32
    return %c0_i32, %c0_i32_0 : i32, i32
  }
  func.func @transform_9(%arg0: i32) -> (i32, i32) {
    %c0_i32 = arith.constant 0 : i32
    %c0_i32_0 = arith.constant 0 : i32
    %c0_i32_1 = arith.constant 0 : i32
    return %c0_i32, %c0_i32_0 : i32, i32
  }
  func.func @transform_10(%arg0: i32) -> (i32, i32) {
    %c0_i32 = arith.constant 0 : i32
    %c0_i32_0 = arith.constant 0 : i32
    return %arg0, %c0_i32 : i32, i32
  }
  func.func @transform_11(%arg0: i32) -> (i32, i32) {
    %c0_i32 = arith.constant 0 : i32
    %c0_i32_0 = arith.constant 0 : i32
    return %arg0, %c0_i32 : i32, i32
  }
}

</mosaic_0001>

<llo_original>
// kernel: tpu_custom_call.1
$region0: #{tpu_custom_call.1}
  #allocation0 [shape = 'u32[]', space=smem, size = 0x4, offset = 0x4, fixed_abs, tag = 'smem constant byte address 0x4 - core index']
  #allocation1 [shape = 'u32[144,128]{1,0:T(1,128)}', space=vmem, size = 0x12000, scoped, tag = 'internal scratch']
  %s0 = inlined_call_operand.hbm [shape: f32[8,64], index: 0, kind: input, shape index: {}]
  %s1 = inlined_call_operand.hbm [shape: f32[8,32], index: 1, kind: input, shape index: {}]
  %s2 = inlined_call_operand.vmem [shape: f32[64,32], index: 2, kind: input, shape index: {}]
  %s3 = inlined_call_operand.vmem [shape: f32[1,32], index: 3, kind: input, shape index: {}]
  %s4 = inlined_call_operand.vmem [shape: f32[32,64], index: 4, kind: input, shape index: {}]
  %s5 = inlined_call_operand.vmem [shape: f32[1,64], index: 5, kind: input, shape index: {}]
  %s6 = inlined_call_operand.vmem [shape: f32[32,32], index: 6, kind: input, shape index: {}]
  %s7 = inlined_call_operand.vmem [shape: f32[1,32], index: 7, kind: input, shape index: {}]
  %s8 = inlined_call_operand.vmem [shape: f32[32,64], index: 8, kind: input, shape index: {}]
  %s9 = inlined_call_operand.vmem [shape: f32[1,64], index: 9, kind: input, shape index: {}]
  %s10 = inlined_call_operand.hbm [shape: f32[8,64], index: 10, kind: output, shape index: {0}]
  %s11 = inlined_call_operand.hbm [shape: f32[8,64], index: 11, kind: output, shape index: {1}]
  %12 = xla_tuple %s10, %s11
  %s13 = sld [smem:[#allocation0]]
  $region66: #{tpu_custom_call.1} parent=0
    _
  %s15 = ssub.s32 1, %s13
  %s16 = scalar_select 0, %s15, %s13
  $region1: #{tpu_custom_call.1} parent=0
    #allocation2 [shape = 'u8[4096]{0}', space=vmem, size = 0x1000, scoped, tag = 'input window, operand 0, single buffered']
    #allocation3 [shape = 's32[1]{0}', space=sflag, size = 0x4, scoped, tag = 'scoped memory for tpu_custom_call.1']
    #allocation4 [shape = 's32[1]{0}', space=sflag, size = 0x4, scoped, tag = 'scoped memory for tpu_custom_call.1']
    #allocation5 [shape = 'u8[4096]{0}', space=vmem, size = 0x1000, scoped, tag = 'input window, operand 1, single buffered']
    #allocation6 [shape = 's32[1]{0}', space=sflag, size = 0x4, scoped, tag = 'scoped memory for tpu_custom_call.1']
    #allocation7 [shape = 'u8[4096]{0}', space=vmem, size = 0x1000, scoped, tag = 'output window, operand 0, single buffered']
    #allocation8 [shape = 'u8[4096]{0}', space=vmem, size = 0x1000, scoped, tag = 'output window, operand 1, single buffered']
    #allocation9 [shape = 's32[1]{0}', space=sflag, size = 0x4, scoped, tag = 'scoped memory for tpu_custom_call.1']
    %17 = vsyncpa [#allocation3], 0
    %18 = vsyncpa [#allocation6], 0
    %19 = vsyncpa [#allocation4], 0
    %20 = vsyncpa [#allocation9], 0
    // Predicated region
    $region2: #{tpu_custom_call.1} parent=1 // pred_check
      _
    $region3: #{tpu_custom_call.1} parent=1 // pred_check_branch
      %22 = sbr.rel (0) target = $region5
    $region4: #{tpu_custom_call.1} parent=1 // pred_region
      %s24 = ssub.s32 128, 128
      %25 = vsyncadd [#allocation3], %s24
      %s27 = sshll.u32 [#allocation2], 4
      %s28 = int_to_ptr.vmem [resolvable:$true] %s27
      %30 = dma.hbm_to_vmem [thread:$0]  %s0, 128, %s28, [#allocation3]
    $region5: #{tpu_custom_call.1} parent=1 // pred_fallthru
      _
    // Predicated region
    $region6: #{tpu_custom_call.1} parent=1 // pred_check
      _
    $region7: #{tpu_custom_call.1} parent=1 // pred_check_branch
      %32 = sbr.rel (0) target = $region9
    $region8: #{tpu_custom_call.1} parent=1 // pred_region
      %s34 = ssub.s32 128, 128
      %35 = vsyncadd [#allocation6], %s34
      %s37 = sshll.u32 [#allocation5], 4
      %s38 = int_to_ptr.vmem [resolvable:$true] %s37
      %40 = dma.hbm_to_vmem [thread:$0]  %s1, 128, %s38, [#allocation6]
    $region9: #{tpu_custom_call.1} parent=1 // pred_fallthru
      _
    // Predicated region
    $region10: #{tpu_custom_call.1} parent=1 // pred_check
      _
    $region11: #{tpu_custom_call.1} parent=1 // pred_check_branch
      %42 = sbr.rel (0) target = $region13
    $region12: #{tpu_custom_call.1} parent=1 // pred_region
      _
    $region13: #{tpu_custom_call.1} parent=1 // pred_fallthru
      _
    // Predicated region
    $region14: #{tpu_custom_call.1} parent=1 // pred_check
      _
    $region15: #{tpu_custom_call.1} parent=1 // pred_check_branch
      %44 = sbr.rel (0) target = $region17
    $region16: #{tpu_custom_call.1} parent=1 // pred_region
      _
    $region17: #{tpu_custom_call.1} parent=1 // pred_fallthru
      _
    // Predicated region
    $region18: #{tpu_custom_call.1} parent=1 // pred_check
      _
    $region19: #{tpu_custom_call.1} parent=1 // pred_check_branch
      %46 = sbr.rel (0) target = $region21
    $region20: #{tpu_custom_call.1} parent=1 // pred_region
      _
    $region21: #{tpu_custom_call.1} parent=1 // pred_fallthru
      _
    // Predicated region
    $region22: #{tpu_custom_call.1} parent=1 // pred_check
      _
    $region23: #{tpu_custom_call.1} parent=1 // pred_check_branch
      %48 = sbr.rel (0) target = $region25
    $region24: #{tpu_custom_call.1} parent=1 // pred_region
      _
    $region25: #{tpu_custom_call.1} parent=1 // pred_fallthru
      _
    // Predicated region
    $region26: #{tpu_custom_call.1} parent=1 // pred_check
      _
    $region27: #{tpu_custom_call.1} parent=1 // pred_check_branch
      %50 = sbr.rel (0) target = $region29
    $region28: #{tpu_custom_call.1} parent=1 // pred_region
      _
    $region29: #{tpu_custom_call.1} parent=1 // pred_fallthru
      _
    // Predicated region
    $region30: #{tpu_custom_call.1} parent=1 // pred_check
      _
    $region31: #{tpu_custom_call.1} parent=1 // pred_check_branch
      %52 = sbr.rel (0) target = $region33
    $region32: #{tpu_custom_call.1} parent=1 // pred_region
      _
    $region33: #{tpu_custom_call.1} parent=1 // pred_fallthru
      _
    // Predicated region
    $region34: #{tpu_custom_call.1} parent=1 // pred_check
      _
    $region35: #{tpu_custom_call.1} parent=1 // pred_check_branch
      %54 = sbr.rel (0) target = $region37
    $region36: #{tpu_custom_call.1} parent=1 // pred_region
      _
    $region37: #{tpu_custom_call.1} parent=1 // pred_fallthru
      _
    // Predicated region
    $region38: #{tpu_custom_call.1} parent=1 // pred_check
      _
    $region39: #{tpu_custom_call.1} parent=1 // pred_check_branch
      %56 = sbr.rel (0) target = $region41
    $region40: #{tpu_custom_call.1} parent=1 // pred_region
      _
    $region41: #{tpu_custom_call.1} parent=1 // pred_fallthru
      _
    // Predicated region
    $region42: #{tpu_custom_call.1} parent=1 // pred_check
      _
    $region43: #{tpu_custom_call.1} parent=1 // pred_check_branch
      %58 = sbr.rel (0) target = $region45
    $region44: #{tpu_custom_call.1} parent=1 // pred_region
      %59 = dma.done [#allocation3], 128
    $region45: #{tpu_custom_call.1} parent=1 // pred_fallthru
      _
    // Predicated region
    $region46: #{tpu_custom_call.1} parent=1 // pred_check
      _
    $region47: #{tpu_custom_call.1} parent=1 // pred_check_branch
      %61 = sbr.rel (0) target = $region49
    $region48: #{tpu_custom_call.1} parent=1 // pred_region
      %62 = dma.done [#allocation6], 128
    $region49: #{tpu_custom_call.1} parent=1 // pred_fallthru
      _
    %v63 = vld [vmem:[#allocation2] sm:$0xff]
    %v64 = vld [vmem:[#allocation5] sm:$0xff]
    %v65 = vld [vmem:[%s2] sm:$0xff]
    %v66 = vld [vmem:[%s2 + $0x8] sm:$0xff]
    %v67 = vld [vmem:[%s2 + $0x10] sm:$0xff]
    %v68 = vld [vmem:[%s2 + $0x18] sm:$0xff]
    %v69 = vld [vmem:[%s2 + $0x20] sm:$0xff]
    %v70 = vld [vmem:[%s2 + $0x28] sm:$0xff]
    %v71 = vld [vmem:[%s2 + $0x30] sm:$0xff]
    %v72 = vld [vmem:[%s2 + $0x38] sm:$0xff]
    %v73 = vld [vmem:[%s3] sm:$0x1]
    %v75 = vlaneseq
    %v76 = vshrl.u32 %v75, 7
    %v77 = vsub.s32 0, %v76
    %v78 = vrot.slane %v73, %v77
    %vm80 = vcmask 523264
    %v82 = vsel %vm80, %v63, 0
    %84 = vmatprep.subr.mxu0 0.0
    %85 = vmatpush1.msra.mxu0 0.0
    %86 = vmatprep.subr.mxu0 0.0
    %87 = vmatpush1.msra.mxu0 0.0
    %88 = vmatprep.subr.mxu0 0.0
    %89 = vmatpush1.msra.mxu0 0.0
    %90 = vmatprep.subr.mxu0 0.0
    %91 = vmatpush1.msra.mxu0 0.0
    %92 = vmatprep.subr.mxu0 0.0
    %93 = vmatpush1.msra.mxu0 0.0
    %94 = vmatprep.subr.mxu0 0.0
    %95 = vmatpush1.msra.mxu0 0.0
    %96 = vmatprep.subr.mxu0 0.0
    %97 = vmatpush1.msra.mxu0 0.0
    %98 = vmatprep.subr.mxu0 0.0
    %99 = vmatpush1.msra.mxu0 0.0
    %100 = vmatprep.subr.mxu0 0.0
    %101 = vmatpush1.msra.mxu0 %v72
    %102 = vmatprep.subr.mxu0 0.0
    %103 = vmatpush1.msra.mxu0 %v71
    %104 = vmatprep.subr.mxu0 0.0
    %105 = vmatpush1.msra.mxu0 %v70
    %106 = vmatprep.subr.mxu0 0.0
    %107 = vmatpush1.msra.mxu0 %v69
    %108 = vmatprep.subr.mxu0 0.0
    %109 = vmatpush1.msra.mxu0 %v68
    %110 = vmatprep.subr.mxu0 0.0
    %111 = vmatpush1.msra.mxu0 %v67
    %112 = vmatprep.subr.mxu0 0.0
    %113 = vmatpush1.msra.mxu0 %v66
    %114 = vmatprep.subr.mxu0 0.0
    %115 = vmatpush1.msra.mxu0 %v65
    %116 = vmatprep.subr.mxu0 0.0
    %117 = vmatpush2.msra.mxu0 0.0
    %118 = vmatprep.subr.mxu0 0.0
    %119 = vmatpush2.msra.mxu0 0.0
    %120 = vmatprep.subr.mxu0 0.0
    %121 = vmatpush2.msra.mxu0 0.0
    %122 = vmatprep.subr.mxu0 0.0
    %123 = vmatpush2.msra.mxu0 0.0
    %124 = vmatprep.subr.mxu0 0.0
    %125 = vmatpush2.msra.mxu0 0.0
    %126 = vmatprep.subr.mxu0 0.0
    %127 = vmatpush2.msra.mxu0 0.0
    %128 = vmatprep.subr.mxu0 0.0
    %129 = vmatpush2.msra.mxu0 0.0
    %130 = vmatprep.subr.mxu0 0.0
    %131 = vmatpush2.msra.mxu0 0.0
    %132 = vmatprep.subr.mxu0 0.0
    %133 = vmatpush2.msra.mxu0 0.0
    %134 = vmatprep.subr.mxu0 0.0
    %135 = vmatpush2.msra.mxu0 0.0
    %136 = vmatprep.subr.mxu0 0.0
    %137 = vmatpush2.msra.mxu0 0.0
    %138 = vmatprep.subr.mxu0 0.0
    %139 = vmatpush2.msra.mxu0 0.0
    %140 = vmatprep.subr.mxu0 0.0
    %141 = vmatpush2.msra.mxu0 0.0
    %142 = vmatprep.subr.mxu0 0.0
    %143 = vmatpush2.msra.mxu0 0.0
    %144 = vmatprep.subr.mxu0 0.0
    %145 = vmatpush2.msra.mxu0 0.0
    %146 = vmatprep.subr.mxu0 0.0
    %147 = vmatpush2.msra.mxu0 0.0
    %148 = vmatprep.mubr.f32.mxu0 0.0
    %149 = vmatmul.mubr.f32.gmra.mxu0 %v82
    %v150 = vpop.f32.mrf.mxu0
    %v151 = vadd.f32 %v78, %v150
    %v152 = vpop.f32.mrf.mxu0
    %153 = vdwg.mxu0
    %v154 = vtanh.pop %v151
    %v155 = vld [vmem:[%s4] sm:$0xff]
    %v156 = vld [vmem:[%s4 + $0x8] sm:$0xff]
    %v157 = vld [vmem:[%s4 + $0x10] sm:$0xff]
    %v158 = vld [vmem:[%s4 + $0x18] sm:$0xff]
    %v159 = vld [vmem:[%s5] sm:$0x1]
    %v161 = vlaneseq
    %v162 = vshrl.u32 %v161, 7
    %v163 = vsub.s32 0, %v162
    %v164 = vrot.slane %v159, %v163
    %vm166 = vcmask 261120
    %v168 = vsel %vm166, %v154, 0
    %170 = vmatprep.subr.mxu0 0.0
    %171 = vmatpush1.msra.mxu0 0.0
    %172 = vmatprep.subr.mxu0 0.0
    %173 = vmatpush1.msra.mxu0 0.0
    %174 = vmatprep.subr.mxu0 0.0
    %175 = vmatpush1.msra.mxu0 0.0
    %176 = vmatprep.subr.mxu0 0.0
    %177 = vmatpush1.msra.mxu0 0.0
    %178 = vmatprep.subr.mxu0 0.0
    %179 = vmatpush1.msra.mxu0 0.0
    %180 = vmatprep.subr.mxu0 0.0
    %181 = vmatpush1.msra.mxu0 0.0
    %182 = vmatprep.subr.mxu0 0.0
    %183 = vmatpush1.msra.mxu0 0.0
    %184 = vmatprep.subr.mxu0 0.0
    %185 = vmatpush1.msra.mxu0 0.0
    %186 = vmatprep.subr.mxu0 0.0
    %187 = vmatpush1.msra.mxu0 0.0
    %188 = vmatprep.subr.mxu0 0.0
    %189 = vmatpush1.msra.mxu0 0.0
    %190 = vmatprep.subr.mxu0 0.0
    %191 = vmatpush1.msra.mxu0 0.0
    %192 = vmatprep.subr.mxu0 0.0
    %193 = vmatpush1.msra.mxu0 0.0
    %194 = vmatprep.subr.mxu0 0.0
    %195 = vmatpush1.msra.mxu0 %v158
    %196 = vmatprep.subr.mxu0 0.0
    %197 = vmatpush1.msra.mxu0 %v157
    %198 = vmatprep.subr.mxu0 0.0
    %199 = vmatpush1.msra.mxu0 %v156
    %200 = vmatprep.subr.mxu0 0.0
    %201 = vmatpush1.msra.mxu0 %v155
    %202 = vmatprep.subr.mxu0 0.0
    %203 = vmatpush2.msra.mxu0 0.0
    %204 = vmatprep.subr.mxu0 0.0
    %205 = vmatpush2.msra.mxu0 0.0
    %206 = vmatprep.subr.mxu0 0.0
    %207 = vmatpush2.msra.mxu0 0.0
    %208 = vmatprep.subr.mxu0 0.0
    %209 = vmatpush2.msra.mxu0 0.0
    %210 = vmatprep.subr.mxu0 0.0
    %211 = vmatpush2.msra.mxu0 0.0
    %212 = vmatprep.subr.mxu0 0.0
    %213 = vmatpush2.msra.mxu0 0.0
    %214 = vmatprep.subr.mxu0 0.0
    %215 = vmatpush2.msra.mxu0 0.0
    %216 = vmatprep.subr.mxu0 0.0
    %217 = vmatpush2.msra.mxu0 0.0
    %218 = vmatprep.subr.mxu0 0.0
    %219 = vmatpush2.msra.mxu0 0.0
    %220 = vmatprep.subr.mxu0 0.0
    %221 = vmatpush2.msra.mxu0 0.0
    %222 = vmatprep.subr.mxu0 0.0
    %223 = vmatpush2.msra.mxu0 0.0
    %224 = vmatprep.subr.mxu0 0.0
    %225 = vmatpush2.msra.mxu0 0.0
    %226 = vmatprep.subr.mxu0 0.0
    %227 = vmatpush2.msra.mxu0 0.0
    %228 = vmatprep.subr.mxu0 0.0
    %229 = vmatpush2.msra.mxu0 0.0
    %230 = vmatprep.subr.mxu0 0.0
    %231 = vmatpush2.msra.mxu0 0.0
    %232 = vmatprep.subr.mxu0 0.0
    %233 = vmatpush2.msra.mxu0 0.0
    %234 = vmatprep.mubr.f32.mxu0 0.0
    %235 = vmatmul.mubr.f32.gmra.mxu0 %v168
    %v236 = vpop.f32.mrf.mxu0
    %v237 = vadd.f32 %v164, %v236
    %v238 = vpop.f32.mrf.mxu0
    %239 = vdwg.mxu0
    %v240 = vmul.f32 %v237, 1.442695
    %v241 = vpow.pop %v240
    %243 = vrot.lane.b32.xlu0 %v64, 32
    %v244 = vpop.permute.xlu0 %243
    %v246 = vmul.f32 %v241, %v244
    %248 = vrot.lane.b32.xlu0 %v246, 96
    %v249 = vpop.permute.xlu0 %248
    %v251 = vadd.f32 %v237, %v249
    %v252 = vld [vmem:[%s6] sm:$0xff]
    %v253 = vld [vmem:[%s6 + $0x8] sm:$0xff]
    %v254 = vld [vmem:[%s6 + $0x10] sm:$0xff]
    %v255 = vld [vmem:[%s6 + $0x18] sm:$0xff]
    %v256 = vld [vmem:[%s7] sm:$0x1]
    %v258 = vlaneseq
    %v259 = vshrl.u32 %v258, 7
    %v260 = vsub.s32 0, %v259
    %v261 = vrot.slane %v256, %v260
    %v264 = vsel %vm166, %v251, 0
    %266 = vmatprep.subr.mxu0 0.0
    %267 = vmatpush1.msra.mxu0 0.0
    %268 = vmatprep.subr.mxu0 0.0
    %269 = vmatpush1.msra.mxu0 0.0
    %270 = vmatprep.subr.mxu0 0.0
    %271 = vmatpush1.msra.mxu0 0.0
    %272 = vmatprep.subr.mxu0 0.0
    %273 = vmatpush1.msra.mxu0 0.0
    %274 = vmatprep.subr.mxu0 0.0
    %275 = vmatpush1.msra.mxu0 0.0
    %276 = vmatprep.subr.mxu0 0.0
    %277 = vmatpush1.msra.mxu0 0.0
    %278 = vmatprep.subr.mxu0 0.0
    %279 = vmatpush1.msra.mxu0 0.0
    %280 = vmatprep.subr.mxu0 0.0
    %281 = vmatpush1.msra.mxu0 0.0
    %282 = vmatprep.subr.mxu0 0.0
    %283 = vmatpush1.msra.mxu0 0.0
    %284 = vmatprep.subr.mxu0 0.0
    %285 = vmatpush1.msra.mxu0 0.0
    %286 = vmatprep.subr.mxu0 0.0
    %287 = vmatpush1.msra.mxu0 0.0
    %288 = vmatprep.subr.mxu0 0.0
    %289 = vmatpush1.msra.mxu0 0.0
    %290 = vmatprep.subr.mxu0 0.0
    %291 = vmatpush1.msra.mxu0 %v255
    %292 = vmatprep.subr.mxu0 0.0
    %293 = vmatpush1.msra.mxu0 %v254
    %294 = vmatprep.subr.mxu0 0.0
    %295 = vmatpush1.msra.mxu0 %v253
    %296 = vmatprep.subr.mxu0 0.0
    %297 = vmatpush1.msra.mxu0 %v252
    %298 = vmatprep.subr.mxu0 0.0
    %299 = vmatpush2.msra.mxu0 0.0
    %300 = vmatprep.subr.mxu0 0.0
    %301 = vmatpush2.msra.mxu0 0.0
    %302 = vmatprep.subr.mxu0 0.0
    %303 = vmatpush2.msra.mxu0 0.0
    %304 = vmatprep.subr.mxu0 0.0
    %305 = vmatpush2.msra.mxu0 0.0
    %306 = vmatprep.subr.mxu0 0.0
    %307 = vmatpush2.msra.mxu0 0.0
    %308 = vmatprep.subr.mxu0 0.0
    %309 = vmatpush2.msra.mxu0 0.0
    %310 = vmatprep.subr.mxu0 0.0
    %311 = vmatpush2.msra.mxu0 0.0
    %312 = vmatprep.subr.mxu0 0.0
    %313 = vmatpush2.msra.mxu0 0.0
    %314 = vmatprep.subr.mxu0 0.0
    %315 = vmatpush2.msra.mxu0 0.0
    %316 = vmatprep.subr.mxu0 0.0
    %317 = vmatpush2.msra.mxu0 0.0
    %318 = vmatprep.subr.mxu0 0.0
    %319 = vmatpush2.msra.mxu0 0.0
    %320 = vmatprep.subr.mxu0 0.0
    %321 = vmatpush2.msra.mxu0 0.0
    %322 = vmatprep.subr.mxu0 0.0
    %323 = vmatpush2.msra.mxu0 0.0
    %324 = vmatprep.subr.mxu0 0.0
    %325 = vmatpush2.msra.mxu0 0.0
    %326 = vmatprep.subr.mxu0 0.0
    %327 = vmatpush2.msra.mxu0 0.0
    %328 = vmatprep.subr.mxu0 0.0
    %329 = vmatpush2.msra.mxu0 0.0
    %330 = vmatprep.mubr.f32.mxu0 0.0
    %331 = vmatmul.mubr.f32.gmra.mxu0 %v264
    %v332 = vpop.f32.mrf.mxu0
    %v333 = vadd.f32 %v261, %v332
    %v334 = vpop.f32.mrf.mxu0
    %335 = vdwg.mxu0
    %v336 = vtanh.pop %v333
    %v337 = vld [vmem:[%s8] sm:$0xff]
    %v338 = vld [vmem:[%s8 + $0x8] sm:$0xff]
    %v339 = vld [vmem:[%s8 + $0x10] sm:$0xff]
    %v340 = vld [vmem:[%s8 + $0x18] sm:$0xff]
    %v341 = vld [vmem:[%s9] sm:$0x1]
    %v343 = vlaneseq
    %v344 = vshrl.u32 %v343, 7
    %v345 = vsub.s32 0, %v344
    %v346 = vrot.slane %v341, %v345
    %v349 = vsel %vm166, %v336, 0
    %351 = vmatprep.subr.mxu0 0.0
    %352 = vmatpush1.msra.mxu0 0.0
    %353 = vmatprep.subr.mxu0 0.0
    %354 = vmatpush1.msra.mxu0 0.0
    %355 = vmatprep.subr.mxu0 0.0
    %356 = vmatpush1.msra.mxu0 0.0
    %357 = vmatprep.subr.mxu0 0.0
    %358 = vmatpush1.msra.mxu0 0.0
    %359 = vmatprep.subr.mxu0 0.0
    %360 = vmatpush1.msra.mxu0 0.0
    %361 = vmatprep.subr.mxu0 0.0
    %362 = vmatpush1.msra.mxu0 0.0
    %363 = vmatprep.subr.mxu0 0.0
    %364 = vmatpush1.msra.mxu0 0.0
    %365 = vmatprep.subr.mxu0 0.0
    %366 = vmatpush1.msra.mxu0 0.0
    %367 = vmatprep.subr.mxu0 0.0
    %368 = vmatpush1.msra.mxu0 0.0
    %369 = vmatprep.subr.mxu0 0.0
    %370 = vmatpush1.msra.mxu0 0.0
    %371 = vmatprep.subr.mxu0 0.0
    %372 = vmatpush1.msra.mxu0 0.0
    %373 = vmatprep.subr.mxu0 0.0
    %374 = vmatpush1.msra.mxu0 0.0
    %375 = vmatprep.subr.mxu0 0.0
    %376 = vmatpush1.msra.mxu0 %v340
    %377 = vmatprep.subr.mxu0 0.0
    %378 = vmatpush1.msra.mxu0 %v339
    %379 = vmatprep.subr.mxu0 0.0
    %380 = vmatpush1.msra.mxu0 %v338
    %381 = vmatprep.subr.mxu0 0.0
    %382 = vmatpush1.msra.mxu0 %v337
    %383 = vmatprep.subr.mxu0 0.0
    %384 = vmatpush2.msra.mxu0 0.0
    %385 = vmatprep.subr.mxu0 0.0
    %386 = vmatpush2.msra.mxu0 0.0
    %387 = vmatprep.subr.mxu0 0.0
    %388 = vmatpush2.msra.mxu0 0.0
    %389 = vmatprep.subr.mxu0 0.0
    %390 = vmatpush2.msra.mxu0 0.0
    %391 = vmatprep.subr.mxu0 0.0
    %392 = vmatpush2.msra.mxu0 0.0
    %393 = vmatprep.subr.mxu0 0.0
    %394 = vmatpush2.msra.mxu0 0.0
    %395 = vmatprep.subr.mxu0 0.0
    %396 = vmatpush2.msra.mxu0 0.0
    %397 = vmatprep.subr.mxu0 0.0
    %398 = vmatpush2.msra.mxu0 0.0
    %399 = vmatprep.subr.mxu0 0.0
    %400 = vmatpush2.msra.mxu0 0.0
    %401 = vmatprep.subr.mxu0 0.0
    %402 = vmatpush2.msra.mxu0 0.0
    %403 = vmatprep.subr.mxu0 0.0
    %404 = vmatpush2.msra.mxu0 0.0
    %405 = vmatprep.subr.mxu0 0.0
    %406 = vmatpush2.msra.mxu0 0.0
    %407 = vmatprep.subr.mxu0 0.0
    %408 = vmatpush2.msra.mxu0 0.0
    %409 = vmatprep.subr.mxu0 0.0
    %410 = vmatpush2.msra.mxu0 0.0
    %411 = vmatprep.subr.mxu0 0.0
    %412 = vmatpush2.msra.mxu0 0.0
    %413 = vmatprep.subr.mxu0 0.0
    %414 = vmatpush2.msra.mxu0 0.0
    %415 = vmatprep.mubr.f32.mxu0 0.0
    %416 = vmatmul.mubr.f32.gmra.mxu0 %v349
    %v417 = vpop.f32.mrf.mxu0
    %v418 = vadd.f32 %v346, %v417
    %v419 = vpop.f32.mrf.mxu0
    %420 = vdwg.mxu0
    %421 = vst.msk [vmem:[#allocation7] sm:$0xff] %vm80, %v418
    %422 = vst.msk [vmem:[#allocation8] sm:$0xff] %vm80, %v237
    // Predicated region
    $region50: #{tpu_custom_call.1} parent=1 // pred_check
      _
    $region51: #{tpu_custom_call.1} parent=1 // pred_check_branch
      %424 = sbr.rel (0) target = $region53
    $region52: #{tpu_custom_call.1} parent=1 // pred_region
      %s426 = ssub.s32 128, 128
      %427 = vsyncadd [#allocation4], %s426
      %s429 = sshll.u32 [#allocation7], 4
      %s430 = int_to_ptr.vmem [resolvable:$true] %s429
      %432 = dma.vmem_to_hbm [thread:$0]  %s430, 128, %s10, [#allocation4]
    $region53: #{tpu_custom_call.1} parent=1 // pred_fallthru
      _
    // Predicated region
    $region54: #{tpu_custom_call.1} parent=1 // pred_check
      _
    $region55: #{tpu_custom_call.1} parent=1 // pred_check_branch
      %434 = sbr.rel (0) target = $region57
    $region56: #{tpu_custom_call.1} parent=1 // pred_region
      %s436 = ssub.s32 128, 128
      %437 = vsyncadd [#allocation9], %s436
      %s439 = sshll.u32 [#allocation8], 4
      %s440 = int_to_ptr.vmem [resolvable:$true] %s439
      %442 = dma.vmem_to_hbm [thread:$0]  %s440, 128, %s11, [#allocation9]
    $region57: #{tpu_custom_call.1} parent=1 // pred_fallthru
      _
    // Predicated region
    $region58: #{tpu_custom_call.1} parent=1 // pred_check
      _
    $region59: #{tpu_custom_call.1} parent=1 // pred_check_branch
      %444 = sbr.rel (0) target = $region61
    $region60: #{tpu_custom_call.1} parent=1 // pred_region
      %445 = dma.done [#allocation4], 128
    $region61: #{tpu_custom_call.1} parent=1 // pred_fallthru
      _
    // Predicated region
    $region62: #{tpu_custom_call.1} parent=1 // pred_check
      _
    $region63: #{tpu_custom_call.1} parent=1 // pred_check_branch
      %447 = sbr.rel (0) target = $region65
    $region64: #{tpu_custom_call.1} parent=1 // pred_region
      %448 = dma.done [#allocation9], 128
    $region65: #{tpu_custom_call.1} parent=1 // pred_fallthru
      _
    %449 = vsyncpa [#allocation3], 1
    %450 = vsyncpa [#allocation6], 1
    %451 = vsyncpa [#allocation4], 1
    %452 = vsyncpa [#allocation9], 1

</llo_original>
